<compile_context>
chip_gen: v6e
topology: v6e:2x2x1
jax: 0.10.0
libtpu: 0.0.40
codegen_flags: <defaults>
</compile_context>

<pallas_src>
import functools

import jax
import jax.numpy as jnp
from jax import lax
from jax.experimental import pallas as pl
from jax.experimental.pallas import tpu as pltpu

SELU_ALPHA = 1.6732632423543772848170429916717
SELU_SCALE = 1.0507009873554804934193349852946

LAYER_DIMS = [256, 256, 128, 64, 32, 16, 1]


def _cdiv(a, b):
    return (a + b - 1) // b


def _round_up(n, m):
    return ((n + m - 1) // m) * m


def _selu(x):
    # exp(min(x, 0)) keeps the unselected branch finite (also pad-row safe).
    return SELU_SCALE * jnp.where(
        x > 0, x, SELU_ALPHA * (jnp.exp(jnp.minimum(x, 0.0)) - 1.0))


def _mlp_kernel(x_ref, *refs, act_dtype):
    """refs = (w1, b1, ..., w6, b6, w7t, b7, out_ref).

    x_ref:   (TM, input_dim) bf16 batch tile (streamed).
    w1..w6:  (in, out) bf16, VMEM-resident (constant block index).
    b1..b6:  (1, out)  act_dtype (f32 on v5e, bf16 on v6e/v7x).
    w7t:     (1, 16)   bf16   (last layer weight, torch (out, in) layout).
    b7:      (1, 1)    f32.
    out_ref: (1, TM)   f32    lane-dense: batch on the lane axis.
    """
    out_ref = refs[-1]
    param_refs = refs[:-1]
    n_layers = len(param_refs) // 2

    h = x_ref[...]  # bf16
    for layer in range(n_layers - 1):
        w = param_refs[2 * layer][...]        # bf16 (in, out)
        b = param_refs[2 * layer + 1][...]    # act_dtype (1, out)
        z = jnp.dot(h, w, preferred_element_type=jnp.float32)
        z = z.astype(act_dtype) + b           # bias add + SELU in act_dtype
        h = _selu(z).astype(jnp.bfloat16)     # no-op cast when act_dtype=bf16

    w_last = param_refs[-2][...]              # bf16 (1, 16)
    b_last = param_refs[-1][...]              # f32  (1, 1)
    # (1,16) . (TM,16) contracted on dim 1 of both -> (1, TM): batch already on
    # the lane axis, so the store is a lane-dense vst.
    out = lax.dot_general(
        w_last, h,
        dimension_numbers=(((1,), (1,)), ((), ())),
        preferred_element_type=jnp.float32) + b_last
    out_ref[...] = out.astype(out_ref.dtype)


def init_params(input_dim, key):
    """PyTorch-style init: U(-1/sqrt(fan_in), 1/sqrt(fan_in)).
    Weights stored (in, out) (transposed vs. torch) so the hot path is h @ W."""
    params = []
    dims = [input_dim] + LAYER_DIMS
    for i in range(len(LAYER_DIMS)):
        fan_in, fan_out = dims[i], dims[i + 1]
        key, kw, kb = jax.random.split(key, 3)
        bound = 1.0 / float(fan_in) ** 0.5
        w = jax.random.uniform(kw, (fan_in, fan_out), jnp.float32, -bound, bound)
        b = jax.random.uniform(kb, (1, fan_out), jnp.float32, -bound, bound)
        params.append((w, b))
    return params


def prepare_params(params, act_dtype=jnp.float32):
    """One-time kernel-side parameter layout (review item: pre-cast outside jit).

    bf16 weights (MXU-native, half the resident-VMEM/DMA bytes); hidden biases
    in the epilogue dtype; last layer kept as (1, 16) bf16 weight + (1, 1) f32
    bias so the final result lands directly in the lane-dense (1, TM) layout.
    """
    act_dtype = jnp.dtype(act_dtype)
    flat = []
    n = len(params)
    for i, (w, b) in enumerate(params):
        if i == n - 1:
            flat.append(jnp.asarray(w).T.reshape(1, -1).astype(jnp.bfloat16))
            flat.append(jnp.asarray(b).reshape(1, 1).astype(jnp.float32))
        else:
            flat.append(jnp.asarray(w).astype(jnp.bfloat16))
            flat.append(jnp.asarray(b).reshape(1, -1).astype(act_dtype))
    return tuple(flat)


def _choose_tiling(batch, desired_tm, num_cores):
    """Balanced batch tiles; >=2 tiles on multi-TC chips when batch allows.

    Multi-tile TM is a multiple of 128 (lane-dense output store, valid
    BlockSpec); single-tile TM equals the (8-aligned) padded batch.
    """
    b8 = _round_up(max(batch, 1), 8)
    num_tiles = _cdiv(b8, desired_tm)
    if num_cores > 1:
        # Only force a split when each core gets at least a 128-row tile.
        num_tiles = max(num_tiles, min(num_cores, b8 // 128))
    tm = _round_up(_cdiv(b8, num_tiles), 8)
    if num_tiles > 1:
        tm = _round_up(tm, 128)
    num_tiles = _cdiv(b8, tm)
    b_pad = tm * num_tiles
    return tm, num_tiles, b_pad


def _cost_estimate(b_pad, input_dim, flat_params):
    dims = [input_dim] + LAYER_DIMS
    macs = sum(dims[i] * dims[i + 1] for i in range(len(LAYER_DIMS)))
    flops = 2 * b_pad * macs
    transcendentals = b_pad * sum(LAYER_DIMS[:-1])           # one exp per SELU
    param_bytes = sum(int(p.size) * p.dtype.itemsize for p in flat_params)
    bytes_accessed = b_pad * input_dim * 2 + b_pad * 4 + param_bytes
    return pl.CostEstimate(flops=flops, transcendentals=transcendentals,
                           bytes_accessed=bytes_accessed)


@functools.partial(jax.jit,
                   static_argnames=("act_dtype", "desired_tm", "num_cores"))
def neural_net_forward(x, flat_params, *, act_dtype="float32",
                       desired_tm=1024, num_cores=1):
    """x: (B, input_dim) f32 -> (B,) f32 (matches torch .squeeze(1))."""
    B, input_dim = x.shape
    act_dt = jnp.dtype(act_dtype)

    tm, num_tiles, b_pad = _choose_tiling(B, desired_tm, num_cores)

    # Stream x as bf16 (halves DMA + double-buffer; kernel needs bf16 anyway).
    x = x.astype(jnp.bfloat16)
    if b_pad != B:
        x = jnp.pad(x, ((0, b_pad - B), (0, 0)))

    in_specs = [pl.BlockSpec((tm, input_dim), lambda i: (i, 0))]
    # Constant block index -> weights/biases stay VMEM-resident across steps.
    in_specs += [pl.BlockSpec(p.shape, lambda i: (0, 0)) for p in flat_params]
    out_spec = pl.BlockSpec((1, tm), lambda i: (0, i))

    out = pl.pallas_call(
        functools.partial(_mlp_kernel, act_dtype=act_dt),
        out_shape=jax.ShapeDtypeStruct((1, b_pad), jnp.float32),
        grid=(num_tiles,),
        in_specs=in_specs,
        out_specs=out_spec,
        compiler_params=pltpu.CompilerParams(
            dimension_semantics=("parallel",),
            vmem_limit_bytes=32 * 1024 * 1024),
        cost_estimate=_cost_estimate(b_pad, input_dim, flat_params),
    )(x, *flat_params)
    return out[0, :B]


def neural_net_forward_ref(x, params, act_dtype=jnp.float32):
    """Pure-JAX reference with the same numerics as the kernel
    (bf16 matmul inputs, f32 accumulate, bias+SELU in act_dtype)."""
    act_dt = jnp.dtype(act_dtype)
    h = x.astype(jnp.bfloat16)
    n = len(params)
    z = None
    for i, (w, b) in enumerate(params):
        z = jnp.dot(h, w.astype(jnp.bfloat16),
                    preferred_element_type=jnp.float32)
        if i != n - 1:
            z = z.astype(act_dt) + b.astype(act_dt)
            h = _selu(z).astype(jnp.bfloat16)
        else:
            z = z + b.astype(jnp.float32)
    return z[:, 0]


def _device_kind():
    try:
        return jax.devices()[0].device_kind.lower()
    except Exception:
        return ""


def _default_act_dtype():
    # v5e and older: no bf16 VPU/EUP -> keep the f32 epilogue.
    kind = _device_kind()
    if any(t in kind for t in ("v2", "v3", "v4", "v5")):
        return "float32"
    return "bfloat16"   # v6e / v7x


def _default_num_cores():
    kind = _device_kind()
    return 2 if ("7x" in kind or "v7" in kind) else 1


if __name__ == "__main__":
    key = jax.random.PRNGKey(0)
    key, kx = jax.random.split(key)

    batch, input_dim = 8, 64
    x = jax.random.normal(kx, (batch, input_dim), dtype=jnp.float32)
    params = init_params(input_dim, key)

    act_dtype = _default_act_dtype()
    num_cores = _default_num_cores()
    flat = prepare_params(params, act_dtype=act_dtype)   # pre-cast once

    tol = 1e-2 if act_dtype == "float32" else 2e-2

    y = jax.block_until_ready(neural_net_forward(
        x, flat, act_dtype=act_dtype, num_cores=num_cores))
    y_ref = neural_net_forward_ref(x, params, act_dtype=act_dtype)
    assert y.shape == (batch,), y.shape
    assert jnp.allclose(y, y_ref, atol=tol, rtol=tol), (y, y_ref)

    # Additional checks: batch not a multiple of the tile (padding path) and a
    # batch large enough to force a multi-tile grid on every chip generation
    # (exercises resident weights across steps and the lane-dense output).
    for batch_n in (300, 2500):
        key, kxn = jax.random.split(key)
        xn = jax.random.normal(kxn, (batch_n, input_dim), dtype=jnp.float32)
        yn = jax.block_until_ready(neural_net_forward(
            xn, flat, act_dtype=act_dtype, num_cores=num_cores))
        yn_ref = neural_net_forward_ref(xn, params, act_dtype=act_dtype)
        assert yn.shape == (batch_n,), yn.shape
        assert jnp.allclose(yn, yn_ref, atol=tol, rtol=tol), (yn, yn_ref)

    print("KERNEL_OK")
</pallas_src>

<mosaic_0001>
module attributes {stable_mosaic.version = 11 : i64} {
  func.func @_mlp_kernel(%arg0: i32, %arg1: memref<8x64xbf16, #tpu.memory_space<vmem>>, %arg2: memref<64x256xbf16, #tpu.memory_space<vmem>>, %arg3: memref<1x256xbf16, #tpu.memory_space<vmem>>, %arg4: memref<256x256xbf16, #tpu.memory_space<vmem>>, %arg5: memref<1x256xbf16, #tpu.memory_space<vmem>>, %arg6: memref<256x128xbf16, #tpu.memory_space<vmem>>, %arg7: memref<1x128xbf16, #tpu.memory_space<vmem>>, %arg8: memref<128x64xbf16, #tpu.memory_space<vmem>>, %arg9: memref<1x64xbf16, #tpu.memory_space<vmem>>, %arg10: memref<64x32xbf16, #tpu.memory_space<vmem>>, %arg11: memref<1x32xbf16, #tpu.memory_space<vmem>>, %arg12: memref<32x16xbf16, #tpu.memory_space<vmem>>, %arg13: memref<1x16xbf16, #tpu.memory_space<vmem>>, %arg14: memref<1x16xbf16, #tpu.memory_space<vmem>>, %arg15: memref<1x1xf32, #tpu.memory_space<vmem>>, %arg16: memref<1x8xf32, #tpu.memory_space<vmem>>) attributes {dimension_semantics = [#tpu.dimension_semantics<parallel>], iteration_bounds = array<i64: 1>, scalar_prefetch = 0 : i64, scratch_operands = 0 : i64, tpu.core_type = #tpu.core_type<tc>, window_params = [{transform_indices = @transform_0, window_bounds = array<i64: 8, 64>}, {pipeline_mode = #tpu.pipeline_mode<synchronous>, transform_indices = @transform_1, window_bounds = array<i64: 64, 256>}, {pipeline_mode = #tpu.pipeline_mode<synchronous>, transform_indices = @transform_2, window_bounds = array<i64: 1, 256>}, {pipeline_mode = #tpu.pipeline_mode<synchronous>, transform_indices = @transform_3, window_bounds = array<i64: 256, 256>}, {pipeline_mode = #tpu.pipeline_mode<synchronous>, transform_indices = @transform_4, window_bounds = array<i64: 1, 256>}, {pipeline_mode = #tpu.pipeline_mode<synchronous>, transform_indices = @transform_5, window_bounds = array<i64: 256, 128>}, {pipeline_mode = #tpu.pipeline_mode<synchronous>, transform_indices = @transform_6, window_bounds = array<i64: 1, 128>}, {pipeline_mode = #tpu.pipeline_mode<synchronous>, transform_indices = @transform_7, window_bounds = array<i64: 128, 64>}, {pipeline_mode = #tpu.pipeline_mode<synchronous>, transform_indices = @transform_8, window_bounds = array<i64: 1, 64>}, {pipeline_mode = #tpu.pipeline_mode<synchronous>, transform_indices = @transform_9, window_bounds = array<i64: 64, 32>}, {pipeline_mode = #tpu.pipeline_mode<synchronous>, transform_indices = @transform_10, window_bounds = array<i64: 1, 32>}, {pipeline_mode = #tpu.pipeline_mode<synchronous>, transform_indices = @transform_11, window_bounds = array<i64: 32, 16>}, {pipeline_mode = #tpu.pipeline_mode<synchronous>, transform_indices = @transform_12, window_bounds = array<i64: 1, 16>}, {pipeline_mode = #tpu.pipeline_mode<synchronous>, transform_indices = @transform_13, window_bounds = array<i64: 1, 16>}, {pipeline_mode = #tpu.pipeline_mode<synchronous>, transform_indices = @transform_14, window_bounds = array<i64: 1, 1>}, {transform_indices = @transform_15, window_bounds = array<i64: 1, 8>}]} {
    %c0 = arith.constant 0 : index
    %c0_0 = arith.constant 0 : index
    %0 = vector.load %arg1[%c0, %c0_0] : memref<8x64xbf16, #tpu.memory_space<vmem>>, vector<8x64xbf16>
    %c0_1 = arith.constant 0 : index
    %c0_2 = arith.constant 0 : index
    %1 = vector.load %arg2[%c0_1, %c0_2] : memref<64x256xbf16, #tpu.memory_space<vmem>>, vector<64x256xbf16>
    %c0_3 = arith.constant 0 : index
    %c0_4 = arith.constant 0 : index
    %2 = vector.load %arg3[%c0_3, %c0_4] : memref<1x256xbf16, #tpu.memory_space<vmem>>, vector<1x256xbf16>
    %cst = arith.constant dense<0.000000e+00> : vector<8x256xf32>
    %3 = tpu.matmul %0, %1, %cst {dimension_numbers = #tpu.dot_dimension_numbers<[1], [0], [0], [1], [0, 0, 1, 1], [], []>} : vector<8x64xbf16>, vector<64x256xbf16>, vector<8x256xf32> -> vector<8x256xf32>
    %4 = arith.truncf %3 : vector<8x256xf32> to vector<8x256xbf16>
    %5 = vector.broadcast %2 : vector<1x256xbf16> to vector<8x256xbf16>
    %6 = arith.addf %4, %5 : vector<8x256xbf16>
    %cst_5 = arith.constant 0.000000e+00 : bf16
    %7 = vector.broadcast %cst_5 : bf16 to vector<8x256xbf16>
    %8 = arith.cmpf ogt, %6, %7 : vector<8x256xbf16>
    %cst_6 = arith.constant 0.000000e+00 : bf16
    %9 = vector.broadcast %cst_6 : bf16 to vector<8x256xbf16>
    %10 = arith.minimumf %6, %9 : vector<8x256xbf16>
    %11 = math.exp %10 : vector<8x256xbf16>
    %cst_7 = arith.constant 1.000000e+00 : bf16
    %12 = vector.broadcast %cst_7 : bf16 to vector<8x256xbf16>
    %13 = arith.subf %11, %12 : vector<8x256xbf16>
    %cst_8 = arith.constant 1.671880e+00 : bf16
    %14 = vector.broadcast %cst_8 : bf16 to vector<8x256xbf16>
    %15 = arith.mulf %14, %13 : vector<8x256xbf16>
    %16 = arith.select %8, %6, %15 : vector<8x256xi1>, vector<8x256xbf16>
    %cst_9 = arith.constant 1.046880e+00 : bf16
    %17 = vector.broadcast %cst_9 : bf16 to vector<8x256xbf16>
    %18 = arith.mulf %17, %16 : vector<8x256xbf16>
    %c0_10 = arith.constant 0 : index
    %c0_11 = arith.constant 0 : index
    %19 = vector.load %arg4[%c0_10, %c0_11] : memref<256x256xbf16, #tpu.memory_space<vmem>>, vector<256x256xbf16>
    %c0_12 = arith.constant 0 : index
    %c0_13 = arith.constant 0 : index
    %20 = vector.load %arg5[%c0_12, %c0_13] : memref<1x256xbf16, #tpu.memory_space<vmem>>, vector<1x256xbf16>
    %cst_14 = arith.constant dense<0.000000e+00> : vector<8x256xf32>
    %21 = tpu.matmul %18, %19, %cst_14 {dimension_numbers = #tpu.dot_dimension_numbers<[1], [0], [0], [1], [0, 0, 1, 1], [], []>} : vector<8x256xbf16>, vector<256x256xbf16>, vector<8x256xf32> -> vector<8x256xf32>
    %22 = arith.truncf %21 : vector<8x256xf32> to vector<8x256xbf16>
    %23 = vector.broadcast %20 : vector<1x256xbf16> to vector<8x256xbf16>
    %24 = arith.addf %22, %23 : vector<8x256xbf16>
    %cst_15 = arith.constant 0.000000e+00 : bf16
    %25 = vector.broadcast %cst_15 : bf16 to vector<8x256xbf16>
    %26 = arith.cmpf ogt, %24, %25 : vector<8x256xbf16>
    %cst_16 = arith.constant 0.000000e+00 : bf16
    %27 = vector.broadcast %cst_16 : bf16 to vector<8x256xbf16>
    %28 = arith.minimumf %24, %27 : vector<8x256xbf16>
    %29 = math.exp %28 : vector<8x256xbf16>
    %cst_17 = arith.constant 1.000000e+00 : bf16
    %30 = vector.broadcast %cst_17 : bf16 to vector<8x256xbf16>
    %31 = arith.subf %29, %30 : vector<8x256xbf16>
    %cst_18 = arith.constant 1.671880e+00 : bf16
    %32 = vector.broadcast %cst_18 : bf16 to vector<8x256xbf16>
    %33 = arith.mulf %32, %31 : vector<8x256xbf16>
    %34 = arith.select %26, %24, %33 : vector<8x256xi1>, vector<8x256xbf16>
    %cst_19 = arith.constant 1.046880e+00 : bf16
    %35 = vector.broadcast %cst_19 : bf16 to vector<8x256xbf16>
    %36 = arith.mulf %35, %34 : vector<8x256xbf16>
    %c0_20 = arith.constant 0 : index
    %c0_21 = arith.constant 0 : index
    %37 = vector.load %arg6[%c0_20, %c0_21] : memref<256x128xbf16, #tpu.memory_space<vmem>>, vector<256x128xbf16>
    %c0_22 = arith.constant 0 : index
    %c0_23 = arith.constant 0 : index
    %38 = vector.load %arg7[%c0_22, %c0_23] : memref<1x128xbf16, #tpu.memory_space<vmem>>, vector<1x128xbf16>
    %cst_24 = arith.constant dense<0.000000e+00> : vector<8x128xf32>
    %39 = tpu.matmul %36, %37, %cst_24 {dimension_numbers = #tpu.dot_dimension_numbers<[1], [0], [0], [1], [0, 0, 1, 1], [], []>} : vector<8x256xbf16>, vector<256x128xbf16>, vector<8x128xf32> -> vector<8x128xf32>
    %40 = arith.truncf %39 : vector<8x128xf32> to vector<8x128xbf16>
    %41 = vector.broadcast %38 : vector<1x128xbf16> to vector<8x128xbf16>
    %42 = arith.addf %40, %41 : vector<8x128xbf16>
    %cst_25 = arith.constant 0.000000e+00 : bf16
    %43 = vector.broadcast %cst_25 : bf16 to vector<8x128xbf16>
    %44 = arith.cmpf ogt, %42, %43 : vector<8x128xbf16>
    %cst_26 = arith.constant 0.000000e+00 : bf16
    %45 = vector.broadcast %cst_26 : bf16 to vector<8x128xbf16>
    %46 = arith.minimumf %42, %45 : vector<8x128xbf16>
    %47 = math.exp %46 : vector<8x128xbf16>
    %cst_27 = arith.constant 1.000000e+00 : bf16
    %48 = vector.broadcast %cst_27 : bf16 to vector<8x128xbf16>
    %49 = arith.subf %47, %48 : vector<8x128xbf16>
    %cst_28 = arith.constant 1.671880e+00 : bf16
    %50 = vector.broadcast %cst_28 : bf16 to vector<8x128xbf16>
    %51 = arith.mulf %50, %49 : vector<8x128xbf16>
    %52 = arith.select %44, %42, %51 : vector<8x128xi1>, vector<8x128xbf16>
    %cst_29 = arith.constant 1.046880e+00 : bf16
    %53 = vector.broadcast %cst_29 : bf16 to vector<8x128xbf16>
    %54 = arith.mulf %53, %52 : vector<8x128xbf16>
    %c0_30 = arith.constant 0 : index
    %c0_31 = arith.constant 0 : index
    %55 = vector.load %arg8[%c0_30, %c0_31] : memref<128x64xbf16, #tpu.memory_space<vmem>>, vector<128x64xbf16>
    %c0_32 = arith.constant 0 : index
    %c0_33 = arith.constant 0 : index
    %56 = vector.load %arg9[%c0_32, %c0_33] : memref<1x64xbf16, #tpu.memory_space<vmem>>, vector<1x64xbf16>
    %cst_34 = arith.constant dense<0.000000e+00> : vector<8x64xf32>
    %57 = tpu.matmul %54, %55, %cst_34 {dimension_numbers = #tpu.dot_dimension_numbers<[1], [0], [0], [1], [0, 0, 1, 1], [], []>} : vector<8x128xbf16>, vector<128x64xbf16>, vector<8x64xf32> -> vector<8x64xf32>
    %58 = arith.truncf %57 : vector<8x64xf32> to vector<8x64xbf16>
    %59 = vector.broadcast %56 : vector<1x64xbf16> to vector<8x64xbf16>
    %60 = arith.addf %58, %59 : vector<8x64xbf16>
    %cst_35 = arith.constant 0.000000e+00 : bf16
    %61 = vector.broadcast %cst_35 : bf16 to vector<8x64xbf16>
    %62 = arith.cmpf ogt, %60, %61 : vector<8x64xbf16>
    %cst_36 = arith.constant 0.000000e+00 : bf16
    %63 = vector.broadcast %cst_36 : bf16 to vector<8x64xbf16>
    %64 = arith.minimumf %60, %63 : vector<8x64xbf16>
    %65 = math.exp %64 : vector<8x64xbf16>
    %cst_37 = arith.constant 1.000000e+00 : bf16
    %66 = vector.broadcast %cst_37 : bf16 to vector<8x64xbf16>
    %67 = arith.subf %65, %66 : vector<8x64xbf16>
    %cst_38 = arith.constant 1.671880e+00 : bf16
    %68 = vector.broadcast %cst_38 : bf16 to vector<8x64xbf16>
    %69 = arith.mulf %68, %67 : vector<8x64xbf16>
    %70 = arith.select %62, %60, %69 : vector<8x64xi1>, vector<8x64xbf16>
    %cst_39 = arith.constant 1.046880e+00 : bf16
    %71 = vector.broadcast %cst_39 : bf16 to vector<8x64xbf16>
    %72 = arith.mulf %71, %70 : vector<8x64xbf16>
    %c0_40 = arith.constant 0 : index
    %c0_41 = arith.constant 0 : index
    %73 = vector.load %arg10[%c0_40, %c0_41] : memref<64x32xbf16, #tpu.memory_space<vmem>>, vector<64x32xbf16>
    %c0_42 = arith.constant 0 : index
    %c0_43 = arith.constant 0 : index
    %74 = vector.load %arg11[%c0_42, %c0_43] : memref<1x32xbf16, #tpu.memory_space<vmem>>, vector<1x32xbf16>
    %cst_44 = arith.constant dense<0.000000e+00> : vector<8x32xf32>
    %75 = tpu.matmul %72, %73, %cst_44 {dimension_numbers = #tpu.dot_dimension_numbers<[1], [0], [0], [1], [0, 0, 1, 1], [], []>} : vector<8x64xbf16>, vector<64x32xbf16>, vector<8x32xf32> -> vector<8x32xf32>
    %76 = arith.truncf %75 : vector<8x32xf32> to vector<8x32xbf16>
    %77 = vector.broadcast %74 : vector<1x32xbf16> to vector<8x32xbf16>
    %78 = arith.addf %76, %77 : vector<8x32xbf16>
    %cst_45 = arith.constant 0.000000e+00 : bf16
    %79 = vector.broadcast %cst_45 : bf16 to vector<8x32xbf16>
    %80 = arith.cmpf ogt, %78, %79 : vector<8x32xbf16>
    %cst_46 = arith.constant 0.000000e+00 : bf16
    %81 = vector.broadcast %cst_46 : bf16 to vector<8x32xbf16>
    %82 = arith.minimumf %78, %81 : vector<8x32xbf16>
    %83 = math.exp %82 : vector<8x32xbf16>
    %cst_47 = arith.constant 1.000000e+00 : bf16
    %84 = vector.broadcast %cst_47 : bf16 to vector<8x32xbf16>
    %85 = arith.subf %83, %84 : vector<8x32xbf16>
    %cst_48 = arith.constant 1.671880e+00 : bf16
    %86 = vector.broadcast %cst_48 : bf16 to vector<8x32xbf16>
    %87 = arith.mulf %86, %85 : vector<8x32xbf16>
    %88 = arith.select %80, %78, %87 : vector<8x32xi1>, vector<8x32xbf16>
    %cst_49 = arith.constant 1.046880e+00 : bf16
    %89 = vector.broadcast %cst_49 : bf16 to vector<8x32xbf16>
    %90 = arith.mulf %89, %88 : vector<8x32xbf16>
    %c0_50 = arith.constant 0 : index
    %c0_51 = arith.constant 0 : index
    %91 = vector.load %arg12[%c0_50, %c0_51] : memref<32x16xbf16, #tpu.memory_space<vmem>>, vector<32x16xbf16>
    %c0_52 = arith.constant 0 : index
    %c0_53 = arith.constant 0 : index
    %92 = vector.load %arg13[%c0_52, %c0_53] : memref<1x16xbf16, #tpu.memory_space<vmem>>, vector<1x16xbf16>
    %cst_54 = arith.constant dense<0.000000e+00> : vector<8x16xf32>
    %93 = tpu.matmul %90, %91, %cst_54 {dimension_numbers = #tpu.dot_dimension_numbers<[1], [0], [0], [1], [0, 0, 1, 1], [], []>} : vector<8x32xbf16>, vector<32x16xbf16>, vector<8x16xf32> -> vector<8x16xf32>
    %94 = arith.truncf %93 : vector<8x16xf32> to vector<8x16xbf16>
    %95 = vector.broadcast %92 : vector<1x16xbf16> to vector<8x16xbf16>
    %96 = arith.addf %94, %95 : vector<8x16xbf16>
    %cst_55 = arith.constant 0.000000e+00 : bf16
    %97 = vector.broadcast %cst_55 : bf16 to vector<8x16xbf16>
    %98 = arith.cmpf ogt, %96, %97 : vector<8x16xbf16>
    %cst_56 = arith.constant 0.000000e+00 : bf16
    %99 = vector.broadcast %cst_56 : bf16 to vector<8x16xbf16>
    %100 = arith.minimumf %96, %99 : vector<8x16xbf16>
    %101 = math.exp %100 : vector<8x16xbf16>
    %cst_57 = arith.constant 1.000000e+00 : bf16
    %102 = vector.broadcast %cst_57 : bf16 to vector<8x16xbf16>
    %103 = arith.subf %101, %102 : vector<8x16xbf16>
    %cst_58 = arith.constant 1.671880e+00 : bf16
    %104 = vector.broadcast %cst_58 : bf16 to vector<8x16xbf16>
    %105 = arith.mulf %104, %103 : vector<8x16xbf16>
    %106 = arith.select %98, %96, %105 : vector<8x16xi1>, vector<8x16xbf16>
    %cst_59 = arith.constant 1.046880e+00 : bf16
    %107 = vector.broadcast %cst_59 : bf16 to vector<8x16xbf16>
    %108 = arith.mulf %107, %106 : vector<8x16xbf16>
    %c0_60 = arith.constant 0 : index
    %c0_61 = arith.constant 0 : index
    %109 = vector.load %arg14[%c0_60, %c0_61] : memref<1x16xbf16, #tpu.memory_space<vmem>>, vector<1x16xbf16>
    %c0_62 = arith.constant 0 : index
    %c0_63 = arith.constant 0 : index
    %110 = vector.load %arg15[%c0_62, %c0_63] : memref<1x1xf32, #tpu.memory_space<vmem>>, vector<1x1xf32>
    %cst_64 = arith.constant dense<0.000000e+00> : vector<1x8xf32>
    %111 = tpu.matmul %109, %108, %cst_64 {dimension_numbers = #tpu.dot_dimension_numbers<[1], [1], [0], [0], [0, 0, 1, 0], [], []>} : vector<1x16xbf16>, vector<8x16xbf16>, vector<1x8xf32> -> vector<1x8xf32>
    %112 = vector.broadcast %110 : vector<1x1xf32> to vector<1x8xf32>
    %113 = arith.addf %111, %112 : vector<1x8xf32>
    %c0_65 = arith.constant 0 : index
    %c0_66 = arith.constant 0 : index
    %114 = vector.load %arg16[%c0_65, %c0_66] : memref<1x8xf32, #tpu.memory_space<vmem>>, vector<1x8xf32>
    tpu.vector_store %arg16[%c0_65, %c0_66], %113 {strides = array<i32>} : memref<1x8xf32, #tpu.memory_space<vmem>>, vector<1x8xf32>,
    return
  }
  func.func @transform_0(%arg0: i32) -> (i32, i32) {
    %c0_i32 = arith.constant 0 : i32
    %c0_i32_0 = arith.constant 0 : i32
    return %arg0, %c0_i32 : i32, i32
  }
  func.func @transform_1(%arg0: i32) -> (i32, i32) {
    %c0_i32 = arith.constant 0 : i32
    %c0_i32_0 = arith.constant 0 : i32
    %c0_i32_1 = arith.constant 0 : i32
    return %c0_i32, %c0_i32_0 : i32, i32
  }
  func.func @transform_2(%arg0: i32) -> (i32, i32) {
    %c0_i32 = arith.constant 0 : i32
    %c0_i32_0 = arith.constant 0 : i32
    %c0_i32_1 = arith.constant 0 : i32
    return %c0_i32, %c0_i32_0 : i32, i32
  }
  func.func @transform_3(%arg0: i32) -> (i32, i32) {
    %c0_i32 = arith.constant 0 : i32
    %c0_i32_0 = arith.constant 0 : i32
    %c0_i32_1 = arith.constant 0 : i32
    return %c0_i32, %c0_i32_0 : i32, i32
  }
  func.func @transform_4(%arg0: i32) -> (i32, i32) {
    %c0_i32 = arith.constant 0 : i32
    %c0_i32_0 = arith.constant 0 : i32
    %c0_i32_1 = arith.constant 0 : i32
    return %c0_i32, %c0_i32_0 : i32, i32
  }
  func.func @transform_5(%arg0: i32) -> (i32, i32) {
    %c0_i32 = arith.constant 0 : i32
    %c0_i32_0 = arith.constant 0 : i32
    %c0_i32_1 = arith.constant 0 : i32
    return %c0_i32, %c0_i32_0 : i32, i32
  }
  func.func @transform_6(%arg0: i32) -> (i32, i32) {
    %c0_i32 = arith.constant 0 : i32
    %c0_i32_0 = arith.constant 0 : i32
    %c0_i32_1 = arith.constant 0 : i32
    return %c0_i32, %c0_i32_0 : i32, i32
  }
  func.func @transform_7(%arg0: i32) -> (i32, i32) {
    %c0_i32 = arith.constant 0 : i32
    %c0_i32_0 = arith.constant 0 : i32
    %c0_i32_1 = arith.constant 0 : i32
    return %c0_i32, %c0_i32_0 : i32, i32
  }
  func.func @transform_8(%arg0: i32) -> (i32, i32) {
    %c0_i32 = arith.constant 0 : i32
    %c0_i32_0 = arith.constant 0 : i32
    %c0_i32_1 = arith.constant 0 : i32
    return %c0_i32, %c0_i32_0 : i32, i32
  }
  func.func @transform_9(%arg0: i32) -> (i32, i32) {
    %c0_i32 = arith.constant 0 : i32
    %c0_i32_0 = arith.constant 0 : i32
    %c0_i32_1 = arith.constant 0 : i32
    return %c0_i32, %c0_i32_0 : i32, i32
  }
  func.func @transform_10(%arg0: i32) -> (i32, i32) {
    %c0_i32 = arith.constant 0 : i32
    %c0_i32_0 = arith.constant 0 : i32
    %c0_i32_1 = arith.constant 0 : i32
    return %c0_i32, %c0_i32_0 : i32, i32
  }
  func.func @transform_11(%arg0: i32) -> (i32, i32) {
    %c0_i32 = arith.constant 0 : i32
    %c0_i32_0 = arith.constant 0 : i32
    %c0_i32_1 = arith.constant 0 : i32
    return %c0_i32, %c0_i32_0 : i32, i32
  }
  func.func @transform_12(%arg0: i32) -> (i32, i32) {
    %c0_i32 = arith.constant 0 : i32
    %c0_i32_0 = arith.constant 0 : i32
    %c0_i32_1 = arith.constant 0 : i32
    return %c0_i32, %c0_i32_0 : i32, i32
  }
  func.func @transform_13(%arg0: i32) -> (i32, i32) {
    %c0_i32 = arith.constant 0 : i32
    %c0_i32_0 = arith.constant 0 : i32
    %c0_i32_1 = arith.constant 0 : i32
    return %c0_i32, %c0_i32_0 : i32, i32
  }
  func.func @transform_14(%arg0: i32) -> (i32, i32) {
    %c0_i32 = arith.constant 0 : i32
    %c0_i32_0 = arith.constant 0 : i32
    %c0_i32_1 = arith.constant 0 : i32
    return %c0_i32, %c0_i32_0 : i32, i32
  }
  func.func @transform_15(%arg0: i32) -> (i32, i32) {
    %c0_i32 = arith.constant 0 : i32
    %c0_i32_0 = arith.constant 0 : i32
    return %c0_i32, %arg0 : i32, i32
  }
}

</mosaic_0001>

<llo_original>
// kernel: neural_net_forward.1
$region0: #{neural_net_forward.1}
  #allocation0 [shape = 'u32[]', space=smem, size = 0x4, offset = 0x4, fixed_abs, tag = 'smem constant byte address 0x4 - core index']
  #allocation1 [shape = 'u32[144,128]{1,0:T(1,128)}', space=vmem, size = 0x12000, scoped, tag = 'internal scratch']
  #allocation2 [shape = 'f32[1,1]{1,0:T(1,128)S(1)}', space=vmem, size = 0x200, scoped, tag = 'scoped memory for neural_net_forward.1']
  %s0 = inlined_call_operand.vmem [shape: bf16[8,64], index: 0, kind: input, shape index: {}]
  %s1 = inlined_call_operand.hbm [shape: bf16[64,256], index: 1, kind: input, shape index: {}]
  %s2 = inlined_call_operand.vmem [shape: bf16[1,256], index: 2, kind: input, shape index: {}]
  %s3 = inlined_call_operand.hbm [shape: bf16[256,256], index: 3, kind: input, shape index: {}]
  %s4 = inlined_call_operand.vmem [shape: bf16[1,256], index: 4, kind: input, shape index: {}]
  %s5 = inlined_call_operand.vmem [shape: bf16[256,128], index: 5, kind: input, shape index: {}]
  %s6 = inlined_call_operand.vmem [shape: bf16[1,128], index: 6, kind: input, shape index: {}]
  %s7 = inlined_call_operand.vmem [shape: bf16[128,64], index: 7, kind: input, shape index: {}]
  %s8 = inlined_call_operand.vmem [shape: bf16[1,64], index: 8, kind: input, shape index: {}]
  %s9 = inlined_call_operand.vmem [shape: bf16[64,32], index: 9, kind: input, shape index: {}]
  %s10 = inlined_call_operand.vmem [shape: bf16[1,32], index: 10, kind: input, shape index: {}]
  %s11 = inlined_call_operand.vmem [shape: bf16[32,16], index: 11, kind: input, shape index: {}]
  %s12 = inlined_call_operand.vmem [shape: bf16[1,16], index: 12, kind: input, shape index: {}]
  %s13 = inlined_call_operand.vmem [shape: bf16[1,16], index: 13, kind: input, shape index: {}]
  %s14 = inlined_call_operand.<no memory space> [shape: f32[1,1], index: 14, kind: input, shape index: {}]
  %s15 = inlined_call_operand.hbm [shape: f32[1,8], index: 15, kind: output, shape index: {}]
  %s16 = sld [smem:[#allocation0]]
  $region78: #{neural_net_forward.1} parent=0
    _
  %s18 = ssub.s32 1, %s16
  %s19 = scalar_select 0, %s18, %s16
  %v20 = vstv %s14
  %21 = vst [vmem:[#allocation2] sm:$0x1] %v20
  $region1: #{neural_net_forward.1} parent=0
    #allocation3 [shape = 'u8[32768]{0}', space=vmem, size = 0x8000, scoped, tag = 'input window, operand 1, single buffered']
    #allocation4 [shape = 's32[1]{0}', space=sflag, size = 0x4, scoped, tag = 'scoped memory for neural_net_forward.1']
    #allocation5 [shape = 's32[1]{0}', space=sflag, size = 0x4, scoped, tag = 'scoped memory for neural_net_forward.1']
    #allocation6 [shape = 'u8[131072]{0}', space=vmem, size = 0x20000, scoped, tag = 'input window, operand 3, single buffered']
    #allocation7 [shape = 's32[1]{0}', space=sflag, size = 0x4, scoped, tag = 'scoped memory for neural_net_forward.1']
    #allocation8 [shape = 'u8[512]{0}', space=vmem, size = 0x400, scoped, tag = 'output window, operand 0, single buffered']
    %22 = vsyncpa [#allocation4], 0
    %23 = vsyncpa [#allocation7], 0
    %24 = vsyncpa [#allocation5], 0
    // Predicated region
    $region2: #{neural_net_forward.1} parent=1 // pred_check
      _
    $region3: #{neural_net_forward.1} parent=1 // pred_check_branch
      %26 = sbr.rel (0) target = $region5
    $region4: #{neural_net_forward.1} parent=1 // pred_region
      _
    $region5: #{neural_net_forward.1} parent=1 // pred_fallthru
      _
    // Predicated region
    $region6: #{neural_net_forward.1} parent=1 // pred_check
      _
    $region7: #{neural_net_forward.1} parent=1 // pred_check_branch
      %28 = sbr.rel (0) target = $region9
    $region8: #{neural_net_forward.1} parent=1 // pred_region
      %s30 = ssub.s32 1024, 1024
      %31 = vsyncadd [#allocation4], %s30
      %s32 = sshll.u32 [#allocation3], 4
      %s33 = int_to_ptr.vmem [resolvable:$true] %s32
      %38 = dma.hbm_to_vmem [thread:$0]  %s1, 1024, %s33, [#allocation4], 128, 128, 8
    $region9: #{neural_net_forward.1} parent=1 // pred_fallthru
      _
    // Predicated region
    $region10: #{neural_net_forward.1} parent=1 // pred_check
      _
    $region11: #{neural_net_forward.1} parent=1 // pred_check_branch
      %40 = sbr.rel (0) target = $region13
    $region12: #{neural_net_forward.1} parent=1 // pred_region
      _
    $region13: #{neural_net_forward.1} parent=1 // pred_fallthru
      _
    // Predicated region
    $region14: #{neural_net_forward.1} parent=1 // pred_check
      _
    $region15: #{neural_net_forward.1} parent=1 // pred_check_branch
      %42 = sbr.rel (0) target = $region17
    $region16: #{neural_net_forward.1} parent=1 // pred_region
      %s44 = ssub.s32 4096, 4096
      %45 = vsyncadd [#allocation7], %s44
      %s46 = sshll.u32 [#allocation6], 4
      %s47 = int_to_ptr.vmem [resolvable:$true] %s46
      %52 = dma.hbm_to_vmem [thread:$0]  %s3, 4096, %s47, [#allocation7], 128, 128, 8
    $region17: #{neural_net_forward.1} parent=1 // pred_fallthru
      _
    // Predicated region
    $region18: #{neural_net_forward.1} parent=1 // pred_check
      _
    $region19: #{neural_net_forward.1} parent=1 // pred_check_branch
      %54 = sbr.rel (0) target = $region21
    $region20: #{neural_net_forward.1} parent=1 // pred_region
      _
    $region21: #{neural_net_forward.1} parent=1 // pred_fallthru
      _
    // Predicated region
    $region22: #{neural_net_forward.1} parent=1 // pred_check
      _
    $region23: #{neural_net_forward.1} parent=1 // pred_check_branch
      %56 = sbr.rel (0) target = $region25
    $region24: #{neural_net_forward.1} parent=1 // pred_region
      _
    $region25: #{neural_net_forward.1} parent=1 // pred_fallthru
      _
    // Predicated region
    $region26: #{neural_net_forward.1} parent=1 // pred_check
      _
    $region27: #{neural_net_forward.1} parent=1 // pred_check_branch
      %58 = sbr.rel (0) target = $region29
    $region28: #{neural_net_forward.1} parent=1 // pred_region
      _
    $region29: #{neural_net_forward.1} parent=1 // pred_fallthru
      _
    // Predicated region
    $region30: #{neural_net_forward.1} parent=1 // pred_check
      _
    $region31: #{neural_net_forward.1} parent=1 // pred_check_branch
      %60 = sbr.rel (0) target = $region33
    $region32: #{neural_net_forward.1} parent=1 // pred_region
      _
    $region33: #{neural_net_forward.1} parent=1 // pred_fallthru
      _
    // Predicated region
    $region34: #{neural_net_forward.1} parent=1 // pred_check
      _
    $region35: #{neural_net_forward.1} parent=1 // pred_check_branch
      %62 = sbr.rel (0) target = $region37
    $region36: #{neural_net_forward.1} parent=1 // pred_region
      _
    $region37: #{neural_net_forward.1} parent=1 // pred_fallthru
      _
    // Predicated region
    $region38: #{neural_net_forward.1} parent=1 // pred_check
      _
    $region39: #{neural_net_forward.1} parent=1 // pred_check_branch
      %64 = sbr.rel (0) target = $region41
    $region40: #{neural_net_forward.1} parent=1 // pred_region
      _
    $region41: #{neural_net_forward.1} parent=1 // pred_fallthru
      _
    // Predicated region
    $region42: #{neural_net_forward.1} parent=1 // pred_check
      _
    $region43: #{neural_net_forward.1} parent=1 // pred_check_branch
      %66 = sbr.rel (0) target = $region45
    $region44: #{neural_net_forward.1} parent=1 // pred_region
      _
    $region45: #{neural_net_forward.1} parent=1 // pred_fallthru
      _
    // Predicated region
    $region46: #{neural_net_forward.1} parent=1 // pred_check
      _
    $region47: #{neural_net_forward.1} parent=1 // pred_check_branch
      %68 = sbr.rel (0) target = $region49
    $region48: #{neural_net_forward.1} parent=1 // pred_region
      _
    $region49: #{neural_net_forward.1} parent=1 // pred_fallthru
      _
    // Predicated region
    $region50: #{neural_net_forward.1} parent=1 // pred_check
      _
    $region51: #{neural_net_forward.1} parent=1 // pred_check_branch
      %70 = sbr.rel (0) target = $region53
    $region52: #{neural_net_forward.1} parent=1 // pred_region
      _
    $region53: #{neural_net_forward.1} parent=1 // pred_fallthru
      _
    // Predicated region
    $region54: #{neural_net_forward.1} parent=1 // pred_check
      _
    $region55: #{neural_net_forward.1} parent=1 // pred_check_branch
      %72 = sbr.rel (0) target = $region57
    $region56: #{neural_net_forward.1} parent=1 // pred_region
      _
    $region57: #{neural_net_forward.1} parent=1 // pred_fallthru
      _
    // Predicated region
    $region58: #{neural_net_forward.1} parent=1 // pred_check
      _
    $region59: #{neural_net_forward.1} parent=1 // pred_check_branch
      %74 = sbr.rel (0) target = $region61
    $region60: #{neural_net_forward.1} parent=1 // pred_region
      _
    $region61: #{neural_net_forward.1} parent=1 // pred_fallthru
      _
    // Predicated region
    $region62: #{neural_net_forward.1} parent=1 // pred_check
      _
    $region63: #{neural_net_forward.1} parent=1 // pred_check_branch
      %76 = sbr.rel (0) target = $region65
    $region64: #{neural_net_forward.1} parent=1 // pred_region
      %77 = dma.done [#allocation4], 1024
    $region65: #{neural_net_forward.1} parent=1 // pred_fallthru
      _
    // Predicated region
    $region66: #{neural_net_forward.1} parent=1 // pred_check
      _
    $region67: #{neural_net_forward.1} parent=1 // pred_check_branch
      %79 = sbr.rel (0) target = $region69
    $region68: #{neural_net_forward.1} parent=1 // pred_region
      %80 = dma.done [#allocation7], 4096
    $region69: #{neural_net_forward.1} parent=1 // pred_fallthru
      _
    %v85 = vld [vmem:[%s0] sm:$0xf]
    %v86 = vld [vmem:[#allocation3] sm:$0xff]
    %v87 = vld [vmem:[#allocation3 + $0x8] sm:$0xff]
    %v88 = vld [vmem:[#allocation3 + $0x10] sm:$0xff]
    %v89 = vld [vmem:[#allocation3 + $0x18] sm:$0xff]
    %v90 = vld [vmem:[#allocation3 + $0x20] sm:$0xff]
    %v91 = vld [vmem:[#allocation3 + $0x28] sm:$0xff]
    %v92 = vld [vmem:[#allocation3 + $0x30] sm:$0xff]
    %v93 = vld [vmem:[#allocation3 + $0x38] sm:$0xff]
    %v94 = vld [vmem:[%s2] sm:$0x3]
    %v103 = vunpack.c.l.b16 %v86
    %v104 = vunpack.c.h.b16 %v86
    %v105 = vunpack.c.l.b16 %v87
    %v106 = vunpack.c.h.b16 %v87
    %v107 = vunpack.c.l.b16 %v88
    %v108 = vunpack.c.h.b16 %v88
    %v109 = vunpack.c.l.b16 %v89
    %v110 = vunpack.c.h.b16 %v89
    %v111 = vunpack.c.l.b16 %v90
    %v112 = vunpack.c.h.b16 %v90
    %v113 = vunpack.c.l.b16 %v91
    %v114 = vunpack.c.h.b16 %v91
    %v115 = vunpack.c.l.b16 %v92
    %v116 = vunpack.c.h.b16 %v92
    %v117 = vunpack.c.l.b16 %v93
    %v118 = vunpack.c.h.b16 %v93
    %v119 = vpack.c.b16 %v105, %v103
    %v120 = vpack.c.b16 %v106, %v104
    %v121 = vpack.c.b16 %v109, %v107
    %v122 = vpack.c.b16 %v110, %v108
    %v123 = vpack.c.b16 %v113, %v111
    %v124 = vpack.c.b16 %v114, %v112
    %v125 = vpack.c.b16 %v117, %v115
    %v126 = vpack.c.b16 %v118, %v116
    %vm135 = vcmask 523264
    %v137 = vsel %vm135, %v85, 0
    %139 = vmatprep.subr.bf16.mxu0 0
    %140 = vmatpush1.bf16.msra.mxu0 0
    %141 = vmatprep.subr.bf16.mxu0 0
    %142 = vmatpush1.bf16.msra.mxu0 0
    %143 = vmatprep.subr.bf16.mxu0 0
    %144 = vmatpush1.bf16.msra.mxu0 0
    %145 = vmatprep.subr.bf16.mxu0 0
    %146 = vmatpush1.bf16.msra.mxu0 0
    %147 = vmatprep.subr.bf16.mxu0 %v126
    %148 = vmatpush1.bf16.msra.mxu0 %v125
    %149 = vmatprep.subr.bf16.mxu0 %v124
    %150 = vmatpush1.bf16.msra.mxu0 %v123
    %151 = vmatprep.subr.bf16.mxu0 %v122
    %152 = vmatpush1.bf16.msra.mxu0 %v121
    %153 = vmatprep.subr.bf16.mxu0 %v120
    %154 = vmatpush1.bf16.msra.mxu0 %v119
    %155 = vmatprep.subr.bf16.mxu0 0
    %156 = vmatpush2.bf16.msra.mxu0 0
    %157 = vmatprep.subr.bf16.mxu0 0
    %158 = vmatpush2.bf16.msra.mxu0 0
    %159 = vmatprep.subr.bf16.mxu0 0
    %160 = vmatpush2.bf16.msra.mxu0 0
    %161 = vmatprep.subr.bf16.mxu0 0
    %162 = vmatpush2.bf16.msra.mxu0 0
    %163 = vmatprep.subr.bf16.mxu0 0
    %164 = vmatpush2.bf16.msra.mxu0 0
    %165 = vmatprep.subr.bf16.mxu0 0
    %166 = vmatpush2.bf16.msra.mxu0 0
    %167 = vmatprep.subr.bf16.mxu0 0
    %168 = vmatpush2.bf16.msra.mxu0 0
    %169 = vmatprep.subr.bf16.mxu0 0
    %170 = vmatpush2.bf16.msra.mxu0 0
    %171 = vmatprep.mubr.bf16.mxu0 0
    %172 = vmatmul.mubr.bf16.gmra.mxu0 %v137
    %v173 = vpop.f32.mrf.mxu0
    %v174 = vadd.f32 0.0, %v173
    %v175 = vpop.f32.mrf.mxu0
    %v176 = vadd.f32 0.0, %v175
    %v177 = vpop.f32.mrf.mxu0
    %v178 = vpop.f32.mrf.mxu0
    %179 = vdwg.mxu0
    %v180 = vpack.c.bf16 %v174, %v174
    %v181 = vpack.c.bf16 %v176, %v176
    %v184 = vunpack.c.l.s4 1966171168
    %v185 = vunpack.c.0.s8 %v184
    %v186 = vlaneseq
    %v187 = vshrl.u32 %v186, 7
    %v188 = vsub.s32 %v185, %v187
    %v189 = vrot.slane %v94, %v188
    %v190 = vcombine.high %v189, %v189
    %v192 = vunpack.c.l.s4 1966171168
    %v193 = vunpack.c.0.s8 %v192
    %v194 = vlaneseq
    %v195 = vshrl.u32 %v194, 7
    %v196 = vsub.s32 %v193, %v195
    %v197 = vrot.slane %v189, %v196
    %v199 = vunpack.c.l.s4 1966171168
    %v200 = vunpack.c.0.s8 %v199
    %v201 = vlaneseq
    %v202 = vshrl.u32 %v201, 7
    %v203 = vsub.s32 %v200, %v202
    %v204 = vrot.slane %v190, %v203
    %v206 = vpack.i.b16 %v197, %v197
    %v208 = vlaneseq
    %v209 = vshrl.u32 %v208, 7
    %v210 = vsub.s32 0, %v209
    %v211 = vrot.slane %v206, %v210
    %v213 = vpack.i.b16 %v204, %v204
    %v215 = vlaneseq
    %v216 = vshrl.u32 %v215, 7
    %v217 = vsub.s32 0, %v216
    %v218 = vrot.slane %v213, %v217
    %v219 = vadd.bf16 %v180, %v211
    %v220 = vadd.bf16 %v181, %v218
    %vm221 = vcmp.gt.bf16.partialorder %v219, 0
    %vm222 = vcmp.gt.bf16.partialorder %v220, 0
    %v223 = vmin.bf16 %v219, 0
    %v224 = vmin.bf16 %v220, 0
    %v226 = vmul.bf16 %v223, 1069105081
    %v227 = vpow.bf16.pop %v226
    %v229 = vmul.bf16 %v224, 1069105081
    %v230 = vpow.bf16.pop %v229
    %v231 = vsub.bf16 %v227, 1065369472
    %v232 = vsub.bf16 %v230, 1065369472
    %v233 = vmul.bf16 %v231, 1071005654
    %v234 = vmul.bf16 %v232, 1071005654
    %v235 = vsel %vm221, %v219, %v233
    %v236 = vsel %vm222, %v220, %v234
    %v237 = vmul.bf16 %v235, 1065762694
    %v238 = vmul.bf16 %v236, 1065762694
    %v239 = vld [vmem:[#allocation6] sm:$0xff]
    %v240 = vld [vmem:[#allocation6 + $0x8] sm:$0xff]
    %v241 = vld [vmem:[#allocation6 + $0x10] sm:$0xff]
    %v242 = vld [vmem:[#allocation6 + $0x18] sm:$0xff]
    %v243 = vld [vmem:[#allocation6 + $0x20] sm:$0xff]
    %v244 = vld [vmem:[#allocation6 + $0x28] sm:$0xff]
    %v245 = vld [vmem:[#allocation6 + $0x30] sm:$0xff]
    %v246 = vld [vmem:[#allocation6 + $0x38] sm:$0xff]
    %v247 = vld [vmem:[#allocation6 + $0x40] sm:$0xff]
    %v248 = vld [vmem:[#allocation6 + $0x48] sm:$0xff]
    %v249 = vld [vmem:[#allocation6 + $0x50] sm:$0xff]
    %v250 = vld [vmem:[#allocation6 + $0x58] sm:$0xff]
    %v251 = vld [vmem:[#allocation6 + $0x60] sm:$0xff]
    %v252 = vld [vmem:[#allocation6 + $0x68] sm:$0xff]
    %v253 = vld [vmem:[#allocation6 + $0x70] sm:$0xff]
    %v254 = vld [vmem:[#allocation6 + $0x78] sm:$0xff]
    %v255 = vld [vmem:[#allocation6 + $0x80] sm:$0xff]
    %v256 = vld [vmem:[#allocation6 + $0x88] sm:$0xff]
    %v257 = vld [vmem:[#allocation6 + $0x90] sm:$0xff]
    %v258 = vld [vmem:[#allocation6 + $0x98] sm:$0xff]
    %v259 = vld [vmem:[#allocation6 + $0xa0] sm:$0xff]
    %v260 = vld [vmem:[#allocation6 + $0xa8] sm:$0xff]
    %v261 = vld [vmem:[#allocation6 + $0xb0] sm:$0xff]
    %v262 = vld [vmem:[#allocation6 + $0xb8] sm:$0xff]
    %v263 = vld [vmem:[#allocation6 + $0xc0] sm:$0xff]
    %v264 = vld [vmem:[#allocation6 + $0xc8] sm:$0xff]
    %v265 = vld [vmem:[#allocation6 + $0xd0] sm:$0xff]
    %v266 = vld [vmem:[#allocation6 + $0xd8] sm:$0xff]
    %v267 = vld [vmem:[#allocation6 + $0xe0] sm:$0xff]
    %v268 = vld [vmem:[#allocation6 + $0xe8] sm:$0xff]
    %v269 = vld [vmem:[#allocation6 + $0xf0] sm:$0xff]
    %v270 = vld [vmem:[#allocation6 + $0xf8] sm:$0xff]
    %v271 = vld [vmem:[%s4] sm:$0x3]
    %v304 = vunpack.c.l.b16 %v239
    %v305 = vunpack.c.h.b16 %v239
    %v306 = vunpack.c.l.b16 %v240
    %v307 = vunpack.c.h.b16 %v240
    %v308 = vunpack.c.l.b16 %v241
    %v309 = vunpack.c.h.b16 %v241
    %v310 = vunpack.c.l.b16 %v242
    %v311 = vunpack.c.h.b16 %v242
    %v312 = vunpack.c.l.b16 %v243
    %v313 = vunpack.c.h.b16 %v243
    %v314 = vunpack.c.l.b16 %v244
    %v315 = vunpack.c.h.b16 %v244
    %v316 = vunpack.c.l.b16 %v245
    %v317 = vunpack.c.h.b16 %v245
    %v318 = vunpack.c.l.b16 %v246
    %v319 = vunpack.c.h.b16 %v246
    %v320 = vunpack.c.l.b16 %v247
    %v321 = vunpack.c.h.b16 %v247
    %v322 = vunpack.c.l.b16 %v248
    %v323 = vunpack.c.h.b16 %v248
    %v324 = vunpack.c.l.b16 %v249
    %v325 = vunpack.c.h.b16 %v249
    %v326 = vunpack.c.l.b16 %v250
    %v327 = vunpack.c.h.b16 %v250
    %v328 = vunpack.c.l.b16 %v251
    %v329 = vunpack.c.h.b16 %v251
    %v330 = vunpack.c.l.b16 %v252
    %v331 = vunpack.c.h.b16 %v252
    %v332 = vunpack.c.l.b16 %v253
    %v333 = vunpack.c.h.b16 %v253
    %v334 = vunpack.c.l.b16 %v254
    %v335 = vunpack.c.h.b16 %v254
    %v336 = vunpack.c.l.b16 %v255
    %v337 = vunpack.c.h.b16 %v255
    %v338 = vunpack.c.l.b16 %v256
    %v339 = vunpack.c.h.b16 %v256
    %v340 = vunpack.c.l.b16 %v257
    %v341 = vunpack.c.h.b16 %v257
    %v342 = vunpack.c.l.b16 %v258
    %v343 = vunpack.c.h.b16 %v258
    %v344 = vunpack.c.l.b16 %v259
    %v345 = vunpack.c.h.b16 %v259
    %v346 = vunpack.c.l.b16 %v260
    %v347 = vunpack.c.h.b16 %v260
    %v348 = vunpack.c.l.b16 %v261
    %v349 = vunpack.c.h.b16 %v261
    %v350 = vunpack.c.l.b16 %v262
    %v351 = vunpack.c.h.b16 %v262
    %v352 = vunpack.c.l.b16 %v263
    %v353 = vunpack.c.h.b16 %v263
    %v354 = vunpack.c.l.b16 %v264
    %v355 = vunpack.c.h.b16 %v264
    %v356 = vunpack.c.l.b16 %v265
    %v357 = vunpack.c.h.b16 %v265
    %v358 = vunpack.c.l.b16 %v266
    %v359 = vunpack.c.h.b16 %v266
    %v360 = vunpack.c.l.b16 %v267
    %v361 = vunpack.c.h.b16 %v267
    %v362 = vunpack.c.l.b16 %v268
    %v363 = vunpack.c.h.b16 %v268
    %v364 = vunpack.c.l.b16 %v269
    %v365 = vunpack.c.h.b16 %v269
    %v366 = vunpack.c.l.b16 %v270
    %v367 = vunpack.c.h.b16 %v270
    %v368 = vpack.c.b16 %v306, %v304
    %v369 = vpack.c.b16 %v307, %v305
    %v370 = vpack.c.b16 %v310, %v308
    %v371 = vpack.c.b16 %v311, %v309
    %v372 = vpack.c.b16 %v314, %v312
    %v373 = vpack.c.b16 %v315, %v313
    %v374 = vpack.c.b16 %v318, %v316
    %v375 = vpack.c.b16 %v319, %v317
    %v376 = vpack.c.b16 %v322, %v320
    %v377 = vpack.c.b16 %v323, %v321
    %v378 = vpack.c.b16 %v326, %v324
    %v379 = vpack.c.b16 %v327, %v325
    %v380 = vpack.c.b16 %v330, %v328
    %v381 = vpack.c.b16 %v331, %v329
    %v382 = vpack.c.b16 %v334, %v332
    %v383 = vpack.c.b16 %v335, %v333
    %v384 = vpack.c.b16 %v338, %v336
    %v385 = vpack.c.b16 %v339, %v337
    %v386 = vpack.c.b16 %v342, %v340
    %v387 = vpack.c.b16 %v343, %v341
    %v388 = vpack.c.b16 %v346, %v344
    %v389 = vpack.c.b16 %v347, %v345
    %v390 = vpack.c.b16 %v350, %v348
    %v391 = vpack.c.b16 %v351, %v349
    %v392 = vpack.c.b16 %v354, %v352
    %v393 = vpack.c.b16 %v355, %v353
    %v394 = vpack.c.b16 %v358, %v356
    %v395 = vpack.c.b16 %v359, %v357
    %v396 = vpack.c.b16 %v362, %v360
    %v397 = vpack.c.b16 %v363, %v361
    %v398 = vpack.c.b16 %v366, %v364
    %v399 = vpack.c.b16 %v367, %v365
    %432 = vmatprep.subr.bf16.mxu0 %v383
    %433 = vmatpush1.bf16.msra.mxu0 %v382
    %434 = vmatprep.subr.bf16.mxu0 %v381
    %435 = vmatpush1.bf16.msra.mxu0 %v380
    %436 = vmatprep.subr.bf16.mxu0 %v379
    %437 = vmatpush1.bf16.msra.mxu0 %v378
    %438 = vmatprep.subr.bf16.mxu0 %v377
    %439 = vmatpush1.bf16.msra.mxu0 %v376
    %440 = vmatprep.subr.bf16.mxu0 %v375
    %441 = vmatpush1.bf16.msra.mxu0 %v374
    %442 = vmatprep.subr.bf16.mxu0 %v373
    %443 = vmatpush1.bf16.msra.mxu0 %v372
    %444 = vmatprep.subr.bf16.mxu0 %v371
    %445 = vmatpush1.bf16.msra.mxu0 %v370
    %446 = vmatprep.subr.bf16.mxu0 %v369
    %447 = vmatpush1.bf16.msra.mxu0 %v368
    %448 = vmatprep.subr.bf16.mxu0 %v399
    %449 = vmatpush2.bf16.msra.mxu0 %v398
    %450 = vmatprep.subr.bf16.mxu0 %v397
    %451 = vmatpush2.bf16.msra.mxu0 %v396
    %452 = vmatprep.subr.bf16.mxu0 %v395
    %453 = vmatpush2.bf16.msra.mxu0 %v394
    %454 = vmatprep.subr.bf16.mxu0 %v393
    %455 = vmatpush2.bf16.msra.mxu0 %v392
    %456 = vmatprep.subr.bf16.mxu0 %v391
    %457 = vmatpush2.bf16.msra.mxu0 %v390
    %458 = vmatprep.subr.bf16.mxu0 %v389
    %459 = vmatpush2.bf16.msra.mxu0 %v388
    %460 = vmatprep.subr.bf16.mxu0 %v387
    %461 = vmatpush2.bf16.msra.mxu0 %v386
    %462 = vmatprep.subr.bf16.mxu0 %v385
    %463 = vmatpush2.bf16.msra.mxu0 %v384
    %464 = vmatprep.mubr.bf16.mxu0 %v238
    %465 = vmatmul.mubr.bf16.gmra.mxu0 %v237
    %v466 = vpop.f32.mrf.mxu0
    %v467 = vadd.f32 0.0, %v466
    %v468 = vpop.f32.mrf.mxu0
    %v469 = vadd.f32 0.0, %v468
    %v470 = vpop.f32.mrf.mxu0
    %v471 = vpop.f32.mrf.mxu0
    %472 = vdwg.mxu0
    %v473 = vpack.c.bf16 %v467, %v467
    %v474 = vpack.c.bf16 %v469, %v469
    %v477 = vunpack.c.l.s4 1966171168
    %v478 = vunpack.c.0.s8 %v477
    %v479 = vlaneseq
    %v480 = vshrl.u32 %v479, 7
    %v481 = vsub.s32 %v478, %v480
    %v482 = vrot.slane %v271, %v481
    %v483 = vcombine.high %v482, %v482
    %v485 = vunpack.c.l.s4 1966171168
    %v486 = vunpack.c.0.s8 %v485
    %v487 = vlaneseq
    %v488 = vshrl.u32 %v487, 7
    %v489 = vsub.s32 %v486, %v488
    %v490 = vrot.slane %v482, %v489
    %v492 = vunpack.c.l.s4 1966171168
    %v493 = vunpack.c.0.s8 %v492
    %v494 = vlaneseq
    %v495 = vshrl.u32 %v494, 7
    %v496 = vsub.s32 %v493, %v495
    %v497 = vrot.slane %v483, %v496
    %v499 = vpack.i.b16 %v490, %v490
    %v501 = vlaneseq
    %v502 = vshrl.u32 %v501, 7
    %v503 = vsub.s32 0, %v502
    %v504 = vrot.slane %v499, %v503
    %v506 = vpack.i.b16 %v497, %v497
    %v508 = vlaneseq
    %v509 = vshrl.u32 %v508, 7
    %v510 = vsub.s32 0, %v509
    %v511 = vrot.slane %v506, %v510
    %v512 = vadd.bf16 %v473, %v504
    %v513 = vadd.bf16 %v474, %v511
    %vm514 = vcmp.gt.bf16.partialorder %v512, 0
    %vm515 = vcmp.gt.bf16.partialorder %v513, 0
    %v516 = vmin.bf16 %v512, 0
    %v517 = vmin.bf16 %v513, 0
    %v519 = vmul.bf16 %v516, 1069105081
    %v520 = vpow.bf16.pop %v519
    %v522 = vmul.bf16 %v517, 1069105081
    %v523 = vpow.bf16.pop %v522
    %v524 = vsub.bf16 %v520, 1065369472
    %v525 = vsub.bf16 %v523, 1065369472
    %v526 = vmul.bf16 %v524, 1071005654
    %v527 = vmul.bf16 %v525, 1071005654
    %v528 = vsel %vm514, %v512, %v526
    %v529 = vsel %vm515, %v513, %v527
    %v530 = vmul.bf16 %v528, 1065762694
    %v531 = vmul.bf16 %v529, 1065762694
    %v532 = vld [vmem:[%s5] sm:$0xf]
    %v533 = vld [vmem:[%s5 + $0x4] sm:$0xf]
    %v534 = vld [vmem:[%s5 + $0x8] sm:$0xf]
    %v535 = vld [vmem:[%s5 + $0xc] sm:$0xf]
    %v536 = vld [vmem:[%s5 + $0x10] sm:$0xf]
    %v537 = vld [vmem:[%s5 + $0x14] sm:$0xf]
    %v538 = vld [vmem:[%s5 + $0x18] sm:$0xf]
    %v539 = vld [vmem:[%s5 + $0x1c] sm:$0xf]
    %v540 = vld [vmem:[%s5 + $0x20] sm:$0xf]
    %v541 = vld [vmem:[%s5 + $0x24] sm:$0xf]
    %v542 = vld [vmem:[%s5 + $0x28] sm:$0xf]
    %v543 = vld [vmem:[%s5 + $0x2c] sm:$0xf]
    %v544 = vld [vmem:[%s5 + $0x30] sm:$0xf]
    %v545 = vld [vmem:[%s5 + $0x34] sm:$0xf]
    %v546 = vld [vmem:[%s5 + $0x38] sm:$0xf]
    %v547 = vld [vmem:[%s5 + $0x3c] sm:$0xf]
    %v548 = vld [vmem:[%s5 + $0x40] sm:$0xf]
    %v549 = vld [vmem:[%s5 + $0x44] sm:$0xf]
    %v550 = vld [vmem:[%s5 + $0x48] sm:$0xf]
    %v551 = vld [vmem:[%s5 + $0x4c] sm:$0xf]
    %v552 = vld [vmem:[%s5 + $0x50] sm:$0xf]
    %v553 = vld [vmem:[%s5 + $0x54] sm:$0xf]
    %v554 = vld [vmem:[%s5 + $0x58] sm:$0xf]
    %v555 = vld [vmem:[%s5 + $0x5c] sm:$0xf]
    %v556 = vld [vmem:[%s5 + $0x60] sm:$0xf]
    %v557 = vld [vmem:[%s5 + $0x64] sm:$0xf]
    %v558 = vld [vmem:[%s5 + $0x68] sm:$0xf]
    %v559 = vld [vmem:[%s5 + $0x6c] sm:$0xf]
    %v560 = vld [vmem:[%s5 + $0x70] sm:$0xf]
    %v561 = vld [vmem:[%s5 + $0x74] sm:$0xf]
    %v562 = vld [vmem:[%s5 + $0x78] sm:$0xf]
    %v563 = vld [vmem:[%s5 + $0x7c] sm:$0xf]
    %v564 = vld [vmem:[%s6] sm:$0x1]
    %v597 = vunpack.c.l.b16 %v532
    %v598 = vunpack.c.l.b16 %v533
    %v599 = vunpack.c.l.b16 %v534
    %v600 = vunpack.c.l.b16 %v535
    %v601 = vunpack.c.l.b16 %v536
    %v602 = vunpack.c.l.b16 %v537
    %v603 = vunpack.c.l.b16 %v538
    %v604 = vunpack.c.l.b16 %v539
    %v605 = vunpack.c.l.b16 %v540
    %v606 = vunpack.c.l.b16 %v541
    %v607 = vunpack.c.l.b16 %v542
    %v608 = vunpack.c.l.b16 %v543
    %v609 = vunpack.c.l.b16 %v544
    %v610 = vunpack.c.l.b16 %v545
    %v611 = vunpack.c.l.b16 %v546
    %v612 = vunpack.c.l.b16 %v547
    %v613 = vunpack.c.l.b16 %v548
    %v614 = vunpack.c.l.b16 %v549
    %v615 = vunpack.c.l.b16 %v550
    %v616 = vunpack.c.l.b16 %v551
    %v617 = vunpack.c.l.b16 %v552
    %v618 = vunpack.c.l.b16 %v553
    %v619 = vunpack.c.l.b16 %v554
    %v620 = vunpack.c.l.b16 %v555
    %v621 = vunpack.c.l.b16 %v556
    %v622 = vunpack.c.l.b16 %v557
    %v623 = vunpack.c.l.b16 %v558
    %v624 = vunpack.c.l.b16 %v559
    %v625 = vunpack.c.l.b16 %v560
    %v626 = vunpack.c.l.b16 %v561
    %v627 = vunpack.c.l.b16 %v562
    %v628 = vunpack.c.l.b16 %v563
    %v629 = vpack.c.b16 %v598, %v597
    %v630 = vpack.c.b16 %v600, %v599
    %v631 = vpack.c.b16 %v602, %v601
    %v632 = vpack.c.b16 %v604, %v603
    %v633 = vpack.c.b16 %v606, %v605
    %v634 = vpack.c.b16 %v608, %v607
    %v635 = vpack.c.b16 %v610, %v609
    %v636 = vpack.c.b16 %v612, %v611
    %v637 = vpack.c.b16 %v614, %v613
    %v638 = vpack.c.b16 %v616, %v615
    %v639 = vpack.c.b16 %v618, %v617
    %v640 = vpack.c.b16 %v620, %v619
    %v641 = vpack.c.b16 %v622, %v621
    %v642 = vpack.c.b16 %v624, %v623
    %v643 = vpack.c.b16 %v626, %v625
    %v644 = vpack.c.b16 %v628, %v627
    %661 = vmatprep.subr.bf16.mxu0 0
    %662 = vmatpush1.bf16.msra.mxu0 %v636
    %663 = vmatprep.subr.bf16.mxu0 0
    %664 = vmatpush1.bf16.msra.mxu0 %v635
    %665 = vmatprep.subr.bf16.mxu0 0
    %666 = vmatpush1.bf16.msra.mxu0 %v634
    %667 = vmatprep.subr.bf16.mxu0 0
    %668 = vmatpush1.bf16.msra.mxu0 %v633
    %669 = vmatprep.subr.bf16.mxu0 0
    %670 = vmatpush1.bf16.msra.mxu0 %v632
    %671 = vmatprep.subr.bf16.mxu0 0
    %672 = vmatpush1.bf16.msra.mxu0 %v631
    %673 = vmatprep.subr.bf16.mxu0 0
    %674 = vmatpush1.bf16.msra.mxu0 %v630
    %675 = vmatprep.subr.bf16.mxu0 0
    %676 = vmatpush1.bf16.msra.mxu0 %v629
    %677 = vmatprep.subr.bf16.mxu0 0
    %678 = vmatpush2.bf16.msra.mxu0 %v644
    %679 = vmatprep.subr.bf16.mxu0 0
    %680 = vmatpush2.bf16.msra.mxu0 %v643
    %681 = vmatprep.subr.bf16.mxu0 0
    %682 = vmatpush2.bf16.msra.mxu0 %v642
    %683 = vmatprep.subr.bf16.mxu0 0
    %684 = vmatpush2.bf16.msra.mxu0 %v641
    %685 = vmatprep.subr.bf16.mxu0 0
    %686 = vmatpush2.bf16.msra.mxu0 %v640
    %687 = vmatprep.subr.bf16.mxu0 0
    %688 = vmatpush2.bf16.msra.mxu0 %v639
    %689 = vmatprep.subr.bf16.mxu0 0
    %690 = vmatpush2.bf16.msra.mxu0 %v638
    %691 = vmatprep.subr.bf16.mxu0 0
    %692 = vmatpush2.bf16.msra.mxu0 %v637
    %693 = vmatprep.mubr.bf16.mxu0 %v531
    %694 = vmatmul.mubr.bf16.gmra.mxu0 %v530
    %v695 = vpop.f32.mrf.mxu0
    %v696 = vadd.f32 0.0, %v695
    %v697 = vpop.f32.mrf.mxu0
    %v698 = vpop.f32.mrf.mxu0
    %v699 = vpop.f32.mrf.mxu0
    %700 = vdwg.mxu0
    %v701 = vpack.c.bf16 %v696, %v696
    %v703 = vpack.i.b16 %v564, %v564
    %v705 = vlaneseq
    %v706 = vshrl.u32 %v705, 7
    %v707 = vsub.s32 0, %v706
    %v708 = vrot.slane %v703, %v707
    %v709 = vadd.bf16 %v701, %v708
    %vm710 = vcmp.gt.bf16.partialorder %v709, 0
    %v711 = vmin.bf16 %v709, 0
    %v713 = vmul.bf16 %v711, 1069105081
    %v714 = vpow.bf16.pop %v713
    %v715 = vsub.bf16 %v714, 1065369472
    %v716 = vmul.bf16 %v715, 1071005654
    %v717 = vsel %vm710, %v709, %v716
    %v718 = vmul.bf16 %v717, 1065762694
    %v719 = vld [vmem:[%s7] sm:$0xf]
    %v720 = vld [vmem:[%s7 + $0x4] sm:$0xf]
    %v721 = vld [vmem:[%s7 + $0x8] sm:$0xf]
    %v722 = vld [vmem:[%s7 + $0xc] sm:$0xf]
    %v723 = vld [vmem:[%s7 + $0x10] sm:$0xf]
    %v724 = vld [vmem:[%s7 + $0x14] sm:$0xf]
    %v725 = vld [vmem:[%s7 + $0x18] sm:$0xf]
    %v726 = vld [vmem:[%s7 + $0x1c] sm:$0xf]
    %v727 = vld [vmem:[%s7 + $0x20] sm:$0xf]
    %v728 = vld [vmem:[%s7 + $0x24] sm:$0xf]
    %v729 = vld [vmem:[%s7 + $0x28] sm:$0xf]
    %v730 = vld [vmem:[%s7 + $0x2c] sm:$0xf]
    %v731 = vld [vmem:[%s7 + $0x30] sm:$0xf]
    %v732 = vld [vmem:[%s7 + $0x34] sm:$0xf]
    %v733 = vld [vmem:[%s7 + $0x38] sm:$0xf]
    %v734 = vld [vmem:[%s7 + $0x3c] sm:$0xf]
    %v735 = vld [vmem:[%s8] sm:$0x1]
    %v752 = vunpack.c.l.b16 %v719
    %v753 = vunpack.c.l.b16 %v720
    %v754 = vunpack.c.l.b16 %v721
    %v755 = vunpack.c.l.b16 %v722
    %v756 = vunpack.c.l.b16 %v723
    %v757 = vunpack.c.l.b16 %v724
    %v758 = vunpack.c.l.b16 %v725
    %v759 = vunpack.c.l.b16 %v726
    %v760 = vunpack.c.l.b16 %v727
    %v761 = vunpack.c.l.b16 %v728
    %v762 = vunpack.c.l.b16 %v729
    %v763 = vunpack.c.l.b16 %v730
    %v764 = vunpack.c.l.b16 %v731
    %v765 = vunpack.c.l.b16 %v732
    %v766 = vunpack.c.l.b16 %v733
    %v767 = vunpack.c.l.b16 %v734
    %v768 = vpack.c.b16 %v753, %v752
    %v769 = vpack.c.b16 %v755, %v754
    %v770 = vpack.c.b16 %v757, %v756
    %v771 = vpack.c.b16 %v759, %v758
    %v772 = vpack.c.b16 %v761, %v760
    %v773 = vpack.c.b16 %v763, %v762
    %v774 = vpack.c.b16 %v765, %v764
    %v775 = vpack.c.b16 %v767, %v766
    %784 = vmatprep.subr.bf16.mxu0 0
    %785 = vmatpush1.bf16.msra.mxu0 %v775
    %786 = vmatprep.subr.bf16.mxu0 0
    %787 = vmatpush1.bf16.msra.mxu0 %v774
    %788 = vmatprep.subr.bf16.mxu0 0
    %789 = vmatpush1.bf16.msra.mxu0 %v773
    %790 = vmatprep.subr.bf16.mxu0 0
    %791 = vmatpush1.bf16.msra.mxu0 %v772
    %792 = vmatprep.subr.bf16.mxu0 0
    %793 = vmatpush1.bf16.msra.mxu0 %v771
    %794 = vmatprep.subr.bf16.mxu0 0
    %795 = vmatpush1.bf16.msra.mxu0 %v770
    %796 = vmatprep.subr.bf16.mxu0 0
    %797 = vmatpush1.bf16.msra.mxu0 %v769
    %798 = vmatprep.subr.bf16.mxu0 0
    %799 = vmatpush1.bf16.msra.mxu0 %v768
    %800 = vmatprep.subr.bf16.mxu0 0
    %801 = vmatpush2.bf16.msra.mxu0 0
    %802 = vmatprep.subr.bf16.mxu0 0
    %803 = vmatpush2.bf16.msra.mxu0 0
    %804 = vmatprep.subr.bf16.mxu0 0
    %805 = vmatpush2.bf16.msra.mxu0 0
    %806 = vmatprep.subr.bf16.mxu0 0
    %807 = vmatpush2.bf16.msra.mxu0 0
    %808 = vmatprep.subr.bf16.mxu0 0
    %809 = vmatpush2.bf16.msra.mxu0 0
    %810 = vmatprep.subr.bf16.mxu0 0
    %811 = vmatpush2.bf16.msra.mxu0 0
    %812 = vmatprep.subr.bf16.mxu0 0
    %813 = vmatpush2.bf16.msra.mxu0 0
    %814 = vmatprep.subr.bf16.mxu0 0
    %815 = vmatpush2.bf16.msra.mxu0 0
    %816 = vmatprep.mubr.bf16.mxu0 0
    %817 = vmatmul.mubr.bf16.gmra.mxu0 %v718
    %v818 = vpop.f32.mrf.mxu0
    %v819 = vadd.f32 0.0, %v818
    %v820 = vpop.f32.mrf.mxu0
    %v821 = vpop.f32.mrf.mxu0
    %v822 = vpop.f32.mrf.mxu0
    %823 = vdwg.mxu0
    %v824 = vpack.c.bf16 %v819, %v819
    %v826 = vpack.i.b16 %v735, %v735
    %v828 = vlaneseq
    %v829 = vshrl.u32 %v828, 7
    %v830 = vsub.s32 0, %v829
    %v831 = vrot.slane %v826, %v830
    %v832 = vadd.bf16 %v824, %v831
    %vm833 = vcmp.gt.bf16.partialorder %v832, 0
    %v834 = vmin.bf16 %v832, 0
    %v836 = vmul.bf16 %v834, 1069105081
    %v837 = vpow.bf16.pop %v836
    %v838 = vsub.bf16 %v837, 1065369472
    %v839 = vmul.bf16 %v838, 1071005654
    %v840 = vsel %vm833, %v832, %v839
    %v841 = vmul.bf16 %v840, 1065762694
    %v842 = vld [vmem:[%s9] sm:$0xf]
    %v843 = vld [vmem:[%s9 + $0x4] sm:$0xf]
    %v844 = vld [vmem:[%s9 + $0x8] sm:$0xf]
    %v845 = vld [vmem:[%s9 + $0xc] sm:$0xf]
    %v846 = vld [vmem:[%s9 + $0x10] sm:$0xf]
    %v847 = vld [vmem:[%s9 + $0x14] sm:$0xf]
    %v848 = vld [vmem:[%s9 + $0x18] sm:$0xf]
    %v849 = vld [vmem:[%s9 + $0x1c] sm:$0xf]
    %v850 = vld [vmem:[%s10] sm:$0x1]
    %v859 = vunpack.c.l.b16 %v842
    %v860 = vunpack.c.l.b16 %v843
    %v861 = vunpack.c.l.b16 %v844
    %v862 = vunpack.c.l.b16 %v845
    %v863 = vunpack.c.l.b16 %v846
    %v864 = vunpack.c.l.b16 %v847
    %v865 = vunpack.c.l.b16 %v848
    %v866 = vunpack.c.l.b16 %v849
    %v867 = vpack.c.b16 %v860, %v859
    %v868 = vpack.c.b16 %v862, %v861
    %v869 = vpack.c.b16 %v864, %v863
    %v870 = vpack.c.b16 %v866, %v865
    %v876 = vsel %vm135, %v841, 0
    %878 = vmatprep.subr.bf16.mxu0 0
    %879 = vmatpush1.bf16.msra.mxu0 0
    %880 = vmatprep.subr.bf16.mxu0 0
    %881 = vmatpush1.bf16.msra.mxu0 0
    %882 = vmatprep.subr.bf16.mxu0 0
    %883 = vmatpush1.bf16.msra.mxu0 0
    %884 = vmatprep.subr.bf16.mxu0 0
    %885 = vmatpush1.bf16.msra.mxu0 0
    %886 = vmatprep.subr.bf16.mxu0 0
    %887 = vmatpush1.bf16.msra.mxu0 %v870
    %888 = vmatprep.subr.bf16.mxu0 0
    %889 = vmatpush1.bf16.msra.mxu0 %v869
    %890 = vmatprep.subr.bf16.mxu0 0
    %891 = vmatpush1.bf16.msra.mxu0 %v868
    %892 = vmatprep.subr.bf16.mxu0 0
    %893 = vmatpush1.bf16.msra.mxu0 %v867
    %894 = vmatprep.subr.bf16.mxu0 0
    %895 = vmatpush2.bf16.msra.mxu0 0
    %896 = vmatprep.subr.bf16.mxu0 0
    %897 = vmatpush2.bf16.msra.mxu0 0
    %898 = vmatprep.subr.bf16.mxu0 0
    %899 = vmatpush2.bf16.msra.mxu0 0
    %900 = vmatprep.subr.bf16.mxu0 0
    %901 = vmatpush2.bf16.msra.mxu0 0
    %902 = vmatprep.subr.bf16.mxu0 0
    %903 = vmatpush2.bf16.msra.mxu0 0
    %904 = vmatprep.subr.bf16.mxu0 0
    %905 = vmatpush2.bf16.msra.mxu0 0
    %906 = vmatprep.subr.bf16.mxu0 0
    %907 = vmatpush2.bf16.msra.mxu0 0
    %908 = vmatprep.subr.bf16.mxu0 0
    %909 = vmatpush2.bf16.msra.mxu0 0
    %910 = vmatprep.mubr.bf16.mxu0 0
    %911 = vmatmul.mubr.bf16.gmra.mxu0 %v876
    %v912 = vpop.f32.mrf.mxu0
    %v913 = vadd.f32 0.0, %v912
    %v914 = vpop.f32.mrf.mxu0
    %v915 = vpop.f32.mrf.mxu0
    %v916 = vpop.f32.mrf.mxu0
    %917 = vdwg.mxu0
    %v918 = vpack.c.bf16 %v913, %v913
    %v920 = vpack.i.b16 %v850, %v850
    %v922 = vlaneseq
    %v923 = vshrl.u32 %v922, 7
    %v924 = vsub.s32 0, %v923
    %v925 = vrot.slane %v920, %v924
    %v926 = vadd.bf16 %v918, %v925
    %vm927 = vcmp.gt.bf16.partialorder %v926, 0
    %v928 = vmin.bf16 %v926, 0
    %v930 = vmul.bf16 %v928, 1069105081
    %v931 = vpow.bf16.pop %v930
    %v932 = vsub.bf16 %v931, 1065369472
    %v933 = vmul.bf16 %v932, 1071005654
    %v934 = vsel %vm927, %v926, %v933
    %v935 = vmul.bf16 %v934, 1065762694
    %v936 = vld [vmem:[%s11] sm:$0xf]
    %v937 = vld [vmem:[%s11 + $0x4] sm:$0xf]
    %v938 = vld [vmem:[%s11 + $0x8] sm:$0xf]
    %v939 = vld [vmem:[%s11 + $0xc] sm:$0xf]
    %v940 = vld [vmem:[%s12] sm:$0x1]
    %v945 = vunpack.c.l.b16 %v936
    %v946 = vunpack.c.l.b16 %v937
    %v947 = vunpack.c.l.b16 %v938
    %v948 = vunpack.c.l.b16 %v939
    %v949 = vpack.c.b16 %v946, %v945
    %v950 = vpack.c.b16 %v948, %v947
    %vm953 = vcmask 261120
    %v955 = vsel %vm953, %v935, 0
    %957 = vmatprep.subr.bf16.mxu0 0
    %958 = vmatpush1.bf16.msra.mxu0 0
    %959 = vmatprep.subr.bf16.mxu0 0
    %960 = vmatpush1.bf16.msra.mxu0 0
    %961 = vmatprep.subr.bf16.mxu0 0
    %962 = vmatpush1.bf16.msra.mxu0 0
    %963 = vmatprep.subr.bf16.mxu0 0
    %964 = vmatpush1.bf16.msra.mxu0 0
    %965 = vmatprep.subr.bf16.mxu0 0
    %966 = vmatpush1.bf16.msra.mxu0 0
    %967 = vmatprep.subr.bf16.mxu0 0
    %968 = vmatpush1.bf16.msra.mxu0 0
    %969 = vmatprep.subr.bf16.mxu0 0
    %970 = vmatpush1.bf16.msra.mxu0 %v950
    %971 = vmatprep.subr.bf16.mxu0 0
    %972 = vmatpush1.bf16.msra.mxu0 %v949
    %973 = vmatprep.subr.bf16.mxu0 0
    %974 = vmatpush2.bf16.msra.mxu0 0
    %975 = vmatprep.subr.bf16.mxu0 0
    %976 = vmatpush2.bf16.msra.mxu0 0
    %977 = vmatprep.subr.bf16.mxu0 0
    %978 = vmatpush2.bf16.msra.mxu0 0
    %979 = vmatprep.subr.bf16.mxu0 0
    %980 = vmatpush2.bf16.msra.mxu0 0
    %981 = vmatprep.subr.bf16.mxu0 0
    %982 = vmatpush2.bf16.msra.mxu0 0
    %983 = vmatprep.subr.bf16.mxu0 0
    %984 = vmatpush2.bf16.msra.mxu0 0
    %985 = vmatprep.subr.bf16.mxu0 0
    %986 = vmatpush2.bf16.msra.mxu0 0
    %987 = vmatprep.subr.bf16.mxu0 0
    %988 = vmatpush2.bf16.msra.mxu0 0
    %989 = vmatprep.mubr.bf16.mxu0 0
    %990 = vmatmul.mubr.bf16.gmra.mxu0 %v955
    %v991 = vpop.f32.mrf.mxu0
    %v992 = vadd.f32 0.0, %v991
    %v993 = vpop.f32.mrf.mxu0
    %v994 = vpop.f32.mrf.mxu0
    %v995 = vpop.f32.mrf.mxu0
    %996 = vdwg.mxu0
    %v997 = vpack.c.bf16 %v992, %v992
    %v999 = vpack.i.b16 %v940, %v940
    %v1001 = vlaneseq
    %v1002 = vshrl.u32 %v1001, 7
    %v1003 = vsub.s32 0, %v1002
    %v1004 = vrot.slane %v999, %v1003
    %v1005 = vadd.bf16 %v997, %v1004
    %vm1006 = vcmp.gt.bf16.partialorder %v1005, 0
    %v1007 = vmin.bf16 %v1005, 0
    %v1009 = vmul.bf16 %v1007, 1069105081
    %v1010 = vpow.bf16.pop %v1009
    %v1011 = vsub.bf16 %v1010, 1065369472
    %v1012 = vmul.bf16 %v1011, 1071005654
    %v1013 = vsel %vm1006, %v1005, %v1012
    %v1014 = vmul.bf16 %v1013, 1065762694
    %v1015 = vld [vmem:[%s13] sm:$0x1]
    %v1016 = vld [vmem:[#allocation2] sm:$0x1]
    %1018 = vset.pattern.permute.xlu0 0
    %1019 = vperm.xlu0 %1018, %v1016
    %v1020 = vpop.permute.xlu0 %1019
    %v1022 = vlaneseq
    %v1023 = vshrl.u32 %v1022, 7
    %v1024 = vsub.s32 0, %v1023
    %v1025 = vrot.slane %v1020, %v1024
    %vm1026 = vcmask 130048
    %v1028 = vsel %vm1026, %v1015, 0
    %v1031 = vsel %vm1026, %v1014, 0
    %1033 = vmatprep.subr.bf16.mxu0 0
    %1034 = vmatpush1.bf16.xpose.msra.mxu0 0
    %1035 = vmatprep.subr.bf16.mxu0 0
    %1036 = vmatpush1.bf16.xpose.msra.mxu0 0
    %1037 = vmatprep.subr.bf16.mxu0 0
    %1038 = vmatpush1.bf16.xpose.msra.mxu0 0
    %1039 = vmatprep.subr.bf16.mxu0 0
    %1040 = vmatpush1.bf16.xpose.msra.mxu0 0
    %1041 = vmatprep.subr.bf16.mxu0 0
    %1042 = vmatpush1.bf16.xpose.msra.mxu0 0
    %1043 = vmatprep.subr.bf16.mxu0 0
    %1044 = vmatpush1.bf16.xpose.msra.mxu0 0
    %1045 = vmatprep.subr.bf16.mxu0 0
    %1046 = vmatpush1.bf16.xpose.msra.mxu0 0
    %1047 = vmatprep.subr.bf16.mxu0 0
    %1048 = vmatpush1.bf16.xpose.msra.mxu0 %v1031
    %1049 = vmatprep.subr.bf16.mxu0 0
    %1050 = vmatpush2.bf16.xpose.msra.mxu0 0
    %1051 = vmatprep.subr.bf16.mxu0 0
    %1052 = vmatpush2.bf16.xpose.msra.mxu0 0
    %1053 = vmatprep.subr.bf16.mxu0 0
    %1054 = vmatpush2.bf16.xpose.msra.mxu0 0
    %1055 = vmatprep.subr.bf16.mxu0 0
    %1056 = vmatpush2.bf16.xpose.msra.mxu0 0
    %1057 = vmatprep.subr.bf16.mxu0 0
    %1058 = vmatpush2.bf16.xpose.msra.mxu0 0
    %1059 = vmatprep.subr.bf16.mxu0 0
    %1060 = vmatpush2.bf16.xpose.msra.mxu0 0
    %1061 = vmatprep.subr.bf16.mxu0 0
    %1062 = vmatpush2.bf16.xpose.msra.mxu0 0
    %1063 = vmatprep.subr.bf16.mxu0 0
    %1064 = vmatpush2.bf16.xpose.msra.mxu0 0
    %1065 = vmatprep.mubr.bf16.mxu0 0
    %1066 = vmatmul.mubr.bf16.gmra.mxu0 %v1028
    %v1067 = vpop.f32.mrf.mxu0
    %v1068 = vadd.f32 %v1025, %v1067
    %v1069 = vpop.f32.mrf.mxu0
    %v1070 = vpop.f32.mrf.mxu0
    %v1071 = vpop.f32.mrf.mxu0
    %1072 = vdwg.mxu0
    %vm1073 = vcmask 57344
    %1074 = vst.msk [vmem:[#allocation8] sm:$0x1] %vm1073, %v1068
    // Predicated region
    $region70: #{neural_net_forward.1} parent=1 // pred_check
      _
    $region71: #{neural_net_forward.1} parent=1 // pred_check_branch
      %1076 = sbr.rel (0) target = $region73
    $region72: #{neural_net_forward.1} parent=1 // pred_region
      %s1078 = ssub.s32 16, 16
      %1079 = vsyncadd [#allocation5], %s1078
      %s1081 = sshll.u32 [#allocation8], 4
      %s1082 = int_to_ptr.vmem [resolvable:$true] %s1081
      %1084 = dma.vmem_to_hbm [thread:$0]  %s1082, 16, %s15, [#allocation5]
    $region73: #{neural_net_forward.1} parent=1 // pred_fallthru
      _
    // Predicated region
    $region74: #{neural_net_forward.1} parent=1 // pred_check
      _
    $region75: #{neural_net_forward.1} parent=1 // pred_check_branch
      %1086 = sbr.rel (0) target = $region77
    $region76: #{neural_net_forward.1} parent=1 // pred_region
      %1087 = dma.done [#allocation5], 16
    $region77: #{neural_net_forward.1} parent=1 // pred_fallthru
      _
    %1088 = vsyncpa [#allocation4], 1
    %1089 = vsyncpa [#allocation7], 1
    %1090 = vsyncpa [#allocation5], 1

</llo_original>
